<compile_context>
chip_gen: v7x
topology: tpu7x:2x2x1
jax: 0.10.0
libtpu: 0.0.40
codegen_flags: <defaults>
</compile_context>

<pallas_src>
import jax
import jax.numpy as jnp
from jax.experimental import pallas as pl
from jax.experimental.pallas import tpu as pltpu

LANE = 128      # lane width: last-dim store / MXU-N granularity
SUBLANE = 8     # sublane granularity for f32 second-to-last dims


def _round_up(n, m):
    return (n + m - 1) // m * m


def _cdiv(a, b):
    return (a + b - 1) // b


def _linear_kernel(x_ref, w_ref, b_ref, o_ref):
    # Cast happens on the VPU against the VMEM tile (free under MXU/DMA),
    # NOT as a separate HBM pass in the wrapper.
    x = x_ref[...].astype(w_ref.dtype)
    acc = jnp.dot(x, w_ref[...], preferred_element_type=jnp.float32)
    o_ref[...] = (acc + b_ref[...]).astype(o_ref.dtype)


def _device_limits():
    """(vmem_capacity_bytes, tensorcores_per_chip), with conservative fallbacks."""
    kind = ""
    try:
        kind = jax.devices()[0].device_kind.lower()
    except Exception:
        pass
    is_v7 = ("v7" in kind) or ("7x" in kind)
    vmem = None
    try:
        vmem = int(pltpu.get_tpu_info().vmem_capacity_bytes)
    except Exception:
        vmem = None
    if vmem is None:
        if not kind:
            vmem = 64 << 20                       # unknown chip: be conservative
        else:
            vmem = (64 << 20) if is_v7 else (128 << 20)
    cores = 2 if is_v7 else 1
    return vmem, cores


def prepare_params(weight, bias, *, compute_dtype=None, pad_bias_value=0.0):
    """One-time parameter prep. Do NOT call this per forward pass.

    weight: [num_subclasses, input_dim] (PyTorch nn.Linear layout)
    bias:   [num_subclasses]
    Returns (w_t [D, Cp], bias2d [1, Cp] f32, num_subclasses).

    Transposes the weight once and zero-pads the class axis to a multiple of
    128 so the kernel output is lane-dense (unmasked full-lane stores).
    Set pad_bias_value=-inf if the consumer is softmax/argmax and you want to
    use the padded output directly (unpad=False) with no de-pad slice.
    Optionally casts the weight to compute_dtype (e.g. bf16) -- the x tile is
    cast to the same dtype inside the kernel.
    """
    C, D = weight.shape
    Cp = _round_up(max(C, 1), LANE)
    w_dtype = compute_dtype if compute_dtype is not None else weight.dtype
    w_t = jnp.zeros((D, Cp), dtype=w_dtype).at[:, :C].set(weight.T.astype(w_dtype))
    b2 = jnp.full((1, Cp), pad_bias_value, dtype=jnp.float32)
    b2 = b2.at[0, :C].set(bias.astype(jnp.float32))
    return w_t, b2, C


def _choose_tiling(B, D, Cp, x_item, w_item, o_item):
    """Pick (tile_m, tile_n, vmem_limit_bytes) from the per-generation budget."""
    vmem_cap, cores = _device_limits()
    budget = max(vmem_cap - (8 << 20), 16 << 20)     # leave compiler headroom
    b_item = 4                                       # bias held in f32

    def footprint(tile_m, tile_n, n_tiled):
        w_buf = (2 if n_tiled else 1) * D * tile_n * w_item   # dbl-buf if blocked
        b_buf = (2 if n_tiled else 1) * tile_n * b_item
        x_buf = 2 * tile_m * D * x_item                       # dbl-buffered x tile
        o_buf = 2 * tile_m * tile_n * o_item                  # dbl-buffered out tile
        return w_buf + b_buf + x_buf + o_buf

    min_m = min(B, SUBLANE)

    # N (class) axis: keep W^T fully resident in VMEM when it fits; else tile.
    tile_n = Cp
    if footprint(min_m, Cp, False) > budget:
        tile_n = max(Cp - LANE, LANE)
        while tile_n > LANE and footprint(min_m, tile_n, True) > budget:
            tile_n -= LANE
        tile_n = max(tile_n, LANE)
    n_tiled = tile_n < Cp

    # M (batch) axis: biggest multiple of 8 up to 1024 that fits the budget.
    tile_m = min(1024, _round_up(B, SUBLANE))
    while tile_m > SUBLANE and footprint(tile_m, tile_n, n_tiled) > budget:
        tile_m -= SUBLANE
    if tile_m >= B:
        tile_m = B                                    # one full-batch block
    # Megacore (v7x): guarantee >= `cores` M steps when the batch allows it.
    if cores > 1 and B >= cores * SUBLANE and _cdiv(B, tile_m) < cores:
        tile_m = _round_up(_cdiv(B, cores), SUBLANE)

    vmem_limit = int(min(footprint(max(tile_m, 1), tile_n, n_tiled) * 1.25
                         + (4 << 20), budget))
    return tile_m, tile_n, vmem_limit


def subclass_classifier_forward(x, w_t, b2, num_subclasses, *,
                                out_dtype=None, unpad=True):
    """Pallas equivalent of `self.fc(x)` for x of shape [B, input_dim].

    w_t, b2 come from prepare_params (pre-transposed / lane-padded).
    unpad=False skips the de-pad slice (an extra HBM pass) and returns the
    padded (B, Cp) buffer; lanes >= num_subclasses hold pad_bias_value logits.
    """
    B, D = x.shape
    Dw, Cp = w_t.shape
    assert Dw == D and Cp % LANE == 0

    out_dtype = x.dtype if out_dtype is None else out_dtype
    x_item = jnp.dtype(x.dtype).itemsize
    w_item = jnp.dtype(w_t.dtype).itemsize
    o_item = jnp.dtype(out_dtype).itemsize

    tile_m, tile_n, vmem_limit = _choose_tiling(B, D, Cp, x_item, w_item, o_item)
    grid = (_cdiv(B, tile_m), _cdiv(Cp, tile_n))

    cost = pl.CostEstimate(
        flops=2 * B * D * Cp,
        bytes_accessed=B * D * x_item + D * Cp * w_item + B * Cp * o_item,
        transcendentals=0,
    )

    out = pl.pallas_call(
        _linear_kernel,
        out_shape=jax.ShapeDtypeStruct((B, Cp), out_dtype),
        grid_spec=pltpu.PrefetchScalarGridSpec(
            num_scalar_prefetch=0,
            grid=grid,
            in_specs=[
                pl.BlockSpec((tile_m, D), lambda i, j: (i, 0)),   # x tile (pipelined)
                pl.BlockSpec((D, tile_n), lambda i, j: (0, j)),   # W^T (resident when 1 N block)
                pl.BlockSpec((1, tile_n), lambda i, j: (0, j)),   # f32 bias row
            ],
            out_specs=pl.BlockSpec((tile_m, tile_n), lambda i, j: (i, j)),
        ),
        compiler_params=pltpu.CompilerParams(
            dimension_semantics=("parallel", "parallel"),
            vmem_limit_bytes=vmem_limit,
        ),
        cost_estimate=cost,
    )(x, w_t, b2)

    if unpad and Cp != num_subclasses:
        # Extra HBM pass; prefer unpad=False + pad_bias_value=-inf downstream.
        out = out[:, :num_subclasses]
    return out


def init_params(key, input_dim, num_subclasses, dtype=jnp.float32):
    """Deterministic init matching init_linear: trunc_normal(std=2e-5), bias=0."""
    std = 2e-5
    w = std * jax.random.truncated_normal(
        key, -2.0, 2.0, (num_subclasses, input_dim), dtype=jnp.float32)
    b = jnp.zeros((num_subclasses,), dtype=jnp.float32)
    return w.astype(dtype), b.astype(dtype)


if __name__ == "__main__":
    # NOTE: at these toy sizes the pallas_call boundary dwarfs the ~8K FLOPs;
    # this run is a correctness check of the kernel semantics.
    key = jax.random.PRNGKey(0)
    k_x, k_w = jax.random.split(key)

    batch = 8
    input_dim = 32
    num_subclasses = 16

    x = jax.random.normal(k_x, (batch, input_dim), dtype=jnp.float32)
    weight, bias = init_params(k_w, input_dim, num_subclasses)
    ref = x @ weight.T + bias

    # One-time parameter prep (transpose + lane-pad).
    w_t, b2, C = prepare_params(weight, bias)

    # 1) Default path: de-padded output matching nn.Linear exactly.
    out = jax.block_until_ready(subclass_classifier_forward(x, w_t, b2, C))
    assert out.shape == (batch, num_subclasses)
    assert jnp.allclose(out, ref, atol=1e-5, rtol=1e-5)

    # 2) Padded-output path (no post-call HBM slice): logical lanes match ref,
    #    padded lanes hold the pad logit (0 here: zero weight + zero bias).
    out_pad = jax.block_until_ready(
        subclass_classifier_forward(x, w_t, b2, C, unpad=False))
    assert out_pad.shape == (batch, w_t.shape[1])
    assert jnp.allclose(out_pad[:, :num_subclasses], ref, atol=1e-5, rtol=1e-5)
    assert jnp.allclose(out_pad[:, num_subclasses:], 0.0, atol=0.0)

    # 3) bf16 weight path: the x cast now happens inside the kernel.
    w_t_bf, b2_bf, _ = prepare_params(weight, bias, compute_dtype=jnp.bfloat16)
    out_bf = jax.block_until_ready(
        subclass_classifier_forward(x, w_t_bf, b2_bf, C))
    assert out_bf.shape == (batch, num_subclasses)
    assert bool(jnp.all(jnp.isfinite(out_bf)))

    print("KERNEL_OK")
</pallas_src>

<mosaic_0001>
module attributes {stable_mosaic.version = 11 : i64} {
  func.func @_linear_kernel(%arg0: i32, %arg1: i32, %arg2: memref<8x32xf32, #tpu.memory_space<vmem>>, %arg3: memref<32x128xf32, #tpu.memory_space<vmem>>, %arg4: memref<1x128xf32, #tpu.memory_space<vmem>>, %arg5: memref<8x128xf32, #tpu.memory_space<vmem>>) attributes {dimension_semantics = [#tpu.dimension_semantics<parallel>, #tpu.dimension_semantics<parallel>], iteration_bounds = array<i64: 1, 1>, scalar_prefetch = 0 : i64, scratch_operands = 0 : i64, tpu.core_type = #tpu.core_type<tc>, window_params = [{transform_indices = @transform_0, window_bounds = array<i64: 8, 32>}, {transform_indices = @transform_1, window_bounds = array<i64: 32, 128>}, {transform_indices = @transform_2, window_bounds = array<i64: 1, 128>}, {transform_indices = @transform_3, window_bounds = array<i64: 8, 128>}]} {
    %c0 = arith.constant 0 : index
    %c0_0 = arith.constant 0 : index
    %0 = vector.load %arg2[%c0, %c0_0] : memref<8x32xf32, #tpu.memory_space<vmem>>, vector<8x32xf32>
    %c0_1 = arith.constant 0 : index
    %c0_2 = arith.constant 0 : index
    %1 = vector.load %arg3[%c0_1, %c0_2] : memref<32x128xf32, #tpu.memory_space<vmem>>, vector<32x128xf32>
    %cst = arith.constant dense<0.000000e+00> : vector<8x128xf32>
    %2 = tpu.matmul %0, %1, %cst {dimension_numbers = #tpu.dot_dimension_numbers<[1], [0], [0], [1], [0, 0, 1, 1], [], []>} : vector<8x32xf32>, vector<32x128xf32>, vector<8x128xf32> -> vector<8x128xf32>
    %c0_3 = arith.constant 0 : index
    %c0_4 = arith.constant 0 : index
    %3 = vector.load %arg4[%c0_3, %c0_4] : memref<1x128xf32, #tpu.memory_space<vmem>>, vector<1x128xf32>
    %4 = vector.broadcast %3 : vector<1x128xf32> to vector<8x128xf32>
    %5 = arith.addf %2, %4 : vector<8x128xf32>
    %c0_5 = arith.constant 0 : index
    %c0_6 = arith.constant 0 : index
    %6 = vector.load %arg5[%c0_5, %c0_6] : memref<8x128xf32, #tpu.memory_space<vmem>>, vector<8x128xf32>
    tpu.vector_store %arg5[%c0_5, %c0_6], %5 {strides = array<i32>} : memref<8x128xf32, #tpu.memory_space<vmem>>, vector<8x128xf32>,
    return
  }
  func.func @transform_0(%arg0: i32, %arg1: i32) -> (i32, i32) {
    %c0_i32 = arith.constant 0 : i32
    %c0_i32_0 = arith.constant 0 : i32
    return %arg0, %c0_i32 : i32, i32
  }
  func.func @transform_1(%arg0: i32, %arg1: i32) -> (i32, i32) {
    %c0_i32 = arith.constant 0 : i32
    %c0_i32_0 = arith.constant 0 : i32
    return %c0_i32, %arg1 : i32, i32
  }
  func.func @transform_2(%arg0: i32, %arg1: i32) -> (i32, i32) {
    %c0_i32 = arith.constant 0 : i32
    %c0_i32_0 = arith.constant 0 : i32
    return %c0_i32, %arg1 : i32, i32
  }
  func.func @transform_3(%arg0: i32, %arg1: i32) -> (i32, i32) {
    %c0_i32 = arith.constant 0 : i32
    return %arg0, %arg1 : i32, i32
  }
}

</mosaic_0001>

<llo_original>
// kernel: tpu_custom_call.1
$region0: #{tpu_custom_call.1}
  #allocation0 [shape = 'u32[]', space=smem, size = 0x4, offset = 0x4, fixed_abs, tag = 'smem constant byte address 0x4 - core index']
  #allocation1 [shape = 'u32[144,128]{1,0:T(1,128)}', space=vmem, size = 0x12000, scoped, tag = 'internal scratch']
  %s0 = inlined_call_operand.hbm [shape: f32[8,32], index: 0, kind: input, shape index: {}]
  %s1 = inlined_call_operand.hbm [shape: f32[32,128], index: 1, kind: input, shape index: {}]
  %s2 = inlined_call_operand.vmem [shape: f32[1,128], index: 2, kind: input, shape index: {}]
  %s3 = inlined_call_operand.hbm [shape: f32[8,128], index: 3, kind: output, shape index: {}]
  %s4 = sld [smem:[#allocation0]]
  $region30: #{tpu_custom_call.1} parent=0
    _
  %s6 = ssub.s32 1, %s4
  %s7 = scalar_select 0, %s6, %s4
  $region1: #{tpu_custom_call.1} parent=0
    #allocation2 [shape = 'u8[4096]{0}', space=vmem, size = 0x1000, scoped, tag = 'input window, operand 0, single buffered']
    #allocation3 [shape = 's32[1]{0}', space=sflag, size = 0x4, scoped, tag = 'scoped memory for tpu_custom_call.1']
    #allocation4 [shape = 's32[1]{0}', space=sflag, size = 0x4, scoped, tag = 'scoped memory for tpu_custom_call.1']
    #allocation5 [shape = 'u8[16384]{0}', space=vmem, size = 0x4000, scoped, tag = 'input window, operand 1, single buffered']
    #allocation6 [shape = 's32[1]{0}', space=sflag, size = 0x4, scoped, tag = 'scoped memory for tpu_custom_call.1']
    #allocation7 [shape = 'u8[4096]{0}', space=vmem, size = 0x1000, scoped, tag = 'output window, operand 0, single buffered']
    %8 = vsyncpa [#allocation3], 0
    %9 = vsyncpa [#allocation6], 0
    %10 = vsyncpa [#allocation4], 0
    // Predicated region
    $region2: #{tpu_custom_call.1} parent=1 // pred_check
      _
    $region3: #{tpu_custom_call.1} parent=1 // pred_check_branch
      %12 = sbr.rel (0) target = $region5
    $region4: #{tpu_custom_call.1} parent=1 // pred_region
      %s14 = ssub.s32 128, 128
      %15 = vsyncadd [#allocation3], %s14
      %s17 = sshll.u32 [#allocation2], 4
      %s18 = int_to_ptr.vmem [resolvable:$true] %s17
      %20 = dma.hbm_to_vmem [thread:$0]  %s0, 128, %s18, [#allocation3]
    $region5: #{tpu_custom_call.1} parent=1 // pred_fallthru
      _
    // Predicated region
    $region6: #{tpu_custom_call.1} parent=1 // pred_check
      _
    $region7: #{tpu_custom_call.1} parent=1 // pred_check_branch
      %22 = sbr.rel (0) target = $region9
    $region8: #{tpu_custom_call.1} parent=1 // pred_region
      %s24 = ssub.s32 512, 512
      %25 = vsyncadd [#allocation6], %s24
      %s26 = sshll.u32 [#allocation5], 4
      %s27 = int_to_ptr.vmem [resolvable:$true] %s26
      %32 = dma.hbm_to_vmem [thread:$0]  %s1, 512, %s27, [#allocation6], 128, 128, 8
    $region9: #{tpu_custom_call.1} parent=1 // pred_fallthru
      _
    // Predicated region
    $region10: #{tpu_custom_call.1} parent=1 // pred_check
      _
    $region11: #{tpu_custom_call.1} parent=1 // pred_check_branch
      %34 = sbr.rel (0) target = $region13
    $region12: #{tpu_custom_call.1} parent=1 // pred_region
      _
    $region13: #{tpu_custom_call.1} parent=1 // pred_fallthru
      _
    // Predicated region
    $region14: #{tpu_custom_call.1} parent=1 // pred_check
      _
    $region15: #{tpu_custom_call.1} parent=1 // pred_check_branch
      %36 = sbr.rel (0) target = $region17
    $region16: #{tpu_custom_call.1} parent=1 // pred_region
      %37 = dma.done [#allocation3], 128
    $region17: #{tpu_custom_call.1} parent=1 // pred_fallthru
      _
    // Predicated region
    $region18: #{tpu_custom_call.1} parent=1 // pred_check
      _
    $region19: #{tpu_custom_call.1} parent=1 // pred_check_branch
      %39 = sbr.rel (0) target = $region21
    $region20: #{tpu_custom_call.1} parent=1 // pred_region
      %40 = dma.done [#allocation6], 512
    $region21: #{tpu_custom_call.1} parent=1 // pred_fallthru
      _
    %v41 = vld [vmem:[#allocation2] sm:$0xff]
    %v42 = vld [vmem:[#allocation5] sm:$0xff]
    %v43 = vld [vmem:[#allocation5 + $0x8] sm:$0xff]
    %v44 = vld [vmem:[#allocation5 + $0x10] sm:$0xff]
    %v45 = vld [vmem:[#allocation5 + $0x18] sm:$0xff]
    %v46 = vld [vmem:[%s2] sm:$0x1]
    %v48 = vlaneseq
    %v49 = vshrl.u32 %v48, 7
    %v50 = vsub.s32 0, %v49
    %v51 = vrot.slane %v46, %v50
    %vm53 = vcmask 261120
    %v55 = vsel %vm53, %v41, 0
    %57 = vmatprep.subr.mxu0 0.0
    %58 = vmatpush1.msra.mxu0 %v42
    %59 = vmatprep.subr.mxu0 0.0
    %60 = vmatpush1.msra.mxu0 %v43
    %61 = vmatprep.subr.mxu0 0.0
    %62 = vmatpush1.msra.mxu0 %v44
    %63 = vmatprep.subr.mxu0 0.0
    %64 = vmatpush1.msra.mxu0 %v45
    %65 = vmatprep.subr.mxu0 0.0
    %66 = vmatpush1.msra.mxu0 0.0
    %67 = vmatprep.subr.mxu0 0.0
    %68 = vmatpush1.msra.mxu0 0.0
    %69 = vmatprep.subr.mxu0 0.0
    %70 = vmatpush1.msra.mxu0 0.0
    %71 = vmatprep.subr.mxu0 0.0
    %72 = vmatpush1.msra.mxu0 0.0
    %73 = vmatprep.subr.mxu0 0.0
    %74 = vmatpush1.msra.mxu0 0.0
    %75 = vmatprep.subr.mxu0 0.0
    %76 = vmatpush1.msra.mxu0 0.0
    %77 = vmatprep.subr.mxu0 0.0
    %78 = vmatpush1.msra.mxu0 0.0
    %79 = vmatprep.subr.mxu0 0.0
    %80 = vmatpush1.msra.mxu0 0.0
    %81 = vmatprep.subr.mxu0 0.0
    %82 = vmatpush1.msra.mxu0 0.0
    %83 = vmatprep.subr.mxu0 0.0
    %84 = vmatpush1.msra.mxu0 0.0
    %85 = vmatprep.subr.mxu0 0.0
    %86 = vmatpush1.msra.mxu0 0.0
    %87 = vmatprep.subr.mxu0 0.0
    %88 = vmatpush1.msra.mxu0 0.0
    %89 = vmatprep.subr.mxu0 0.0
    %90 = vmatpush1.msra.mxu0 0.0
    %91 = vmatprep.subr.mxu0 0.0
    %92 = vmatpush1.msra.mxu0 0.0
    %93 = vmatprep.subr.mxu0 0.0
    %94 = vmatpush1.msra.mxu0 0.0
    %95 = vmatprep.subr.mxu0 0.0
    %96 = vmatpush1.msra.mxu0 0.0
    %97 = vmatprep.subr.mxu0 0.0
    %98 = vmatpush1.msra.mxu0 0.0
    %99 = vmatprep.subr.mxu0 0.0
    %100 = vmatpush1.msra.mxu0 0.0
    %101 = vmatprep.subr.mxu0 0.0
    %102 = vmatpush1.msra.mxu0 0.0
    %103 = vmatprep.subr.mxu0 0.0
    %104 = vmatpush1.msra.mxu0 0.0
    %105 = vmatprep.subr.mxu0 0.0
    %106 = vmatpush1.msra.mxu0 0.0
    %107 = vmatprep.subr.mxu0 0.0
    %108 = vmatpush1.msra.mxu0 0.0
    %109 = vmatprep.subr.mxu0 0.0
    %110 = vmatpush1.msra.mxu0 0.0
    %111 = vmatprep.subr.mxu0 0.0
    %112 = vmatpush1.msra.mxu0 0.0
    %113 = vmatprep.subr.mxu0 0.0
    %114 = vmatpush1.msra.mxu0 0.0
    %115 = vmatprep.subr.mxu0 0.0
    %116 = vmatpush1.msra.mxu0 0.0
    %117 = vmatprep.subr.mxu0 0.0
    %118 = vmatpush1.msra.mxu0 0.0
    %119 = vmatprep.subr.mxu0 0.0
    %120 = vmatpush1.msra.mxu0 0.0
    %121 = vmatprep.mubr.f32.mxu0 0.0
    %122 = vmatmul.mubr.f32.gmra.mrb[0].mxu0 %v55
    %v123 = vpop.f32.mrb[0].mxu0
    %v124 = vadd.f32 %v51, %v123
    %v125 = vpop.f32.mrb[0].mxu0
    %126 = vdwg.mxu0
    %127 = vst [vmem:[#allocation7] sm:$0xff] %v124
    // Predicated region
    $region22: #{tpu_custom_call.1} parent=1 // pred_check
      _
    $region23: #{tpu_custom_call.1} parent=1 // pred_check_branch
      %129 = sbr.rel (0) target = $region25
    $region24: #{tpu_custom_call.1} parent=1 // pred_region
      %s131 = ssub.s32 128, 128
      %132 = vsyncadd [#allocation4], %s131
      %s134 = sshll.u32 [#allocation7], 4
      %s135 = int_to_ptr.vmem [resolvable:$true] %s134
      %137 = dma.vmem_to_hbm [thread:$0]  %s135, 128, %s3, [#allocation4]
    $region25: #{tpu_custom_call.1} parent=1 // pred_fallthru
      _
    // Predicated region
    $region26: #{tpu_custom_call.1} parent=1 // pred_check
      _
    $region27: #{tpu_custom_call.1} parent=1 // pred_check_branch
      %139 = sbr.rel (0) target = $region29
    $region28: #{tpu_custom_call.1} parent=1 // pred_region
      %140 = dma.done [#allocation4], 128
    $region29: #{tpu_custom_call.1} parent=1 // pred_fallthru
      _
    %141 = vsyncpa [#allocation3], 1
    %142 = vsyncpa [#allocation6], 1
    %143 = vsyncpa [#allocation4], 1

</llo_original>
